<compile_context>
chip_gen: v7x
topology: tpu7x:2x2x1
jax: 0.10.0
libtpu: 0.0.40
codegen_flags: <defaults>
</compile_context>

<pallas_src>
import functools

import jax
import jax.numpy as jnp
from jax import lax
from jax.experimental import pallas as pl
from jax.experimental.pallas import tpu as pltpu

_LANE = 128
_ACC_ROWS = 64   # 8 independent (8,128) f32 accumulator vregs per core -> VPU ILP


def _device_kind() -> str:
    try:
        return jax.devices()[0].device_kind.lower()
    except Exception:
        return ""


def _num_tensorcores(kind: str) -> int:
    # v7x has 2 TensorCores per chip; v5e / v6e have 1.
    return 2 if "7" in kind else 1


def _target_block_bytes(kind: str) -> int:
    # Bigger blocks amortize the ~0.35 us per-grid-step overhead on faster HBM.
    if "7" in kind or "v6" in kind:
        return 8 * 1024 * 1024    # 8 MiB blocks for v6e / v7x
    return 4 * 1024 * 1024        # 4 MiB for v5e / unknown (fits default scoped VMEM)


def _sum_kernel(x_ref, o_ref, *, rows, inner, tile_rows, acc_rows):
    c = pl.program_id(0)          # core / outer split index
    j = pl.program_id(1)          # reduction step within this core's range

    # o_ref is a (acc_rows, 128) f32 accumulator, resident across j (its block index
    # is constant in j) and distinct per core c.
    @pl.when(j == 0)
    def _():
        o_ref[...] = jnp.zeros_like(o_ref)

    blk = c * inner + j                    # intended (unclamped) block index
    full_blocks = rows // tile_rows        # static Python int

    # Fast path: fully-valid block -> pure VPU adds into acc_rows//8 independent
    # vreg chains, no mask.
    @pl.when(blk < full_blocks)
    def _():
        x = x_ref[...].astype(jnp.float32)
        o_ref[...] += jnp.sum(
            x.reshape(tile_rows // acc_rows, acc_rows, _LANE), axis=0)

    # Slow path: last (partial) block or phantom block -> zero-mask invalid rows.
    @pl.when(blk >= full_blocks)
    def _():
        x = x_ref[...].astype(jnp.float32)
        valid = rows - blk * tile_rows     # <= 0 for phantom blocks (fully masked)
        row_ids = lax.broadcasted_iota(jnp.int32, x.shape, 0)
        x = jnp.where(row_ids < valid, x, 0.0)
        o_ref[...] += jnp.sum(
            x.reshape(tile_rows // acc_rows, acc_rows, _LANE), axis=0)


def pallas_sum(x: jax.Array) -> jax.Array:
    """Sum all elements of x, returning a shape-(1,) array (like torch.sum(x)[None])."""
    flat = x.reshape(-1)
    n = flat.shape[0]
    rows = n // _LANE
    n_main = rows * _LANE

    # Sub-lane tail (< 128 elements): summed in plain JAX, negligible traffic.
    # TODO(synk): for n % 128 != 0 the flat[:n_main] slice below also materializes a
    # copy; a fully in-kernel ragged-tail path would keep HBM traffic at exactly 1x.
    tail_sum = jnp.float32(0.0)
    if n_main < n:
        tail_sum = jnp.sum(flat[n_main:].astype(jnp.float32))

    if rows == 0:
        total = tail_sum
    else:
        # Identity view when n % 128 == 0 (the common case).
        x2d = flat[:n_main].reshape(rows, _LANE)
        itemsize = jnp.dtype(x.dtype).itemsize

        kind = _device_kind()
        # Rows per block from a byte budget, rounded to the accumulator width and
        # capped near the actual array size for small inputs.
        budget_rows = max(_ACC_ROWS, _target_block_bytes(kind) // (_LANE * itemsize))
        budget_rows = (budget_rows // _ACC_ROWS) * _ACC_ROWS
        rows_padded = -(-rows // _ACC_ROWS) * _ACC_ROWS
        tile_rows = min(budget_rows, rows_padded)

        nblk = -(-rows // tile_rows)               # number of real blocks
        num_cores = min(_num_tensorcores(kind), nblk)
        inner = -(-nblk // num_cores)              # blocks per core (last may be phantom)

        kernel = functools.partial(
            _sum_kernel, rows=rows, inner=inner,
            tile_rows=tile_rows, acc_rows=_ACC_ROWS)

        # VMEM budget: double-buffered input block + f32 working set + slack.
        in_block_bytes = tile_rows * _LANE * itemsize
        f32_block_bytes = tile_rows * _LANE * 4
        vmem_limit = 2 * in_block_bytes + f32_block_bytes + 8 * 1024 * 1024
        vmem_limit = int(min(max(vmem_limit, 16 * 1024 * 1024), 48 * 1024 * 1024))

        partials = pl.pallas_call(
            kernel,
            out_shape=jax.ShapeDtypeStruct((num_cores * _ACC_ROWS, _LANE), jnp.float32),
            grid=(num_cores, inner),
            in_specs=[
                pl.BlockSpec(
                    (tile_rows, _LANE),
                    # Clamp phantom blocks to the last real block; their contribution
                    # is zeroed by the in-kernel mask.
                    lambda c, j: (jnp.minimum(c * inner + j, nblk - 1), 0),
                )
            ],
            out_specs=pl.BlockSpec((_ACC_ROWS, _LANE), lambda c, j: (c, 0)),
            compiler_params=pltpu.CompilerParams(
                dimension_semantics=("parallel", "arbitrary"),
                vmem_limit_bytes=vmem_limit,
            ),
            cost_estimate=pl.CostEstimate(
                flops=int(n_main),
                transcendentals=0,
                bytes_accessed=int(n_main * itemsize
                                   + num_cores * _ACC_ROWS * _LANE * 4),
            ),
        )(x2d)

        total = jnp.sum(partials, dtype=jnp.float32) + tail_sum

    # Note: like the previous version, accumulation is in f32 even for integer inputs
    # (torch.sum(int32) would return int64); fine for the float inputs this module sees.
    return total.astype(x.dtype).reshape(1)


if __name__ == "__main__":
    key = jax.random.PRNGKey(0)
    # Small NCHW input consistent with the module's forward (any shape works).
    x = jax.random.normal(key, (2, 4, 16, 16), dtype=jnp.float32)

    y = pallas_sum(x)
    jax.block_until_ready(y)

    # Sanity check against pure JAX reference.
    y_ref = jnp.sum(x)[None]
    assert y.shape == (1,)
    assert jnp.allclose(y, y_ref, rtol=1e-4, atol=1e-3), (y, y_ref)

    print("KERNEL_OK")
</pallas_src>

<mosaic_0001>
module attributes {stable_mosaic.version = 11 : i64} {
  func.func @_sum_kernel(%arg0: i32, %arg1: i32, %arg2: memref<64x128xf32, #tpu.memory_space<vmem>>, %arg3: memref<64x128xf32, #tpu.memory_space<vmem>>) attributes {dimension_semantics = [#tpu.dimension_semantics<parallel>, #tpu.dimension_semantics<arbitrary>], iteration_bounds = array<i64: 1, 1>, scalar_prefetch = 0 : i64, scratch_operands = 0 : i64, tpu.core_type = #tpu.core_type<tc>, window_params = [{transform_indices = @transform_0, window_bounds = array<i64: 64, 128>}, {transform_indices = @transform_1, window_bounds = array<i64: 64, 128>}]} {
    %c0_i32 = arith.constant 0 : i32
    %0 = arith.cmpi eq, %arg1, %c0_i32 : i32
    %1 = arith.extui %0 : i1 to i32
    %c0_i32_0 = arith.constant 0 : i32
    %2 = arith.cmpi ne, %1, %c0_i32_0 : i32
    scf.if %2 {
      %cst = arith.constant 0.000000e+00 : f32
      %11 = vector.broadcast %cst : f32 to vector<64x128xf32>
      %c0 = arith.constant 0 : index
      %c0_5 = arith.constant 0 : index
      %12 = vector.load %arg3[%c0, %c0_5] : memref<64x128xf32, #tpu.memory_space<vmem>>, vector<64x128xf32>
      tpu.vector_store %arg3[%c0, %c0_5], %11 {strides = array<i32>} : memref<64x128xf32, #tpu.memory_space<vmem>>, vector<64x128xf32>,
    } else {
    }
    %c1_i32 = arith.constant 1 : i32
    %3 = arith.muli %arg0, %c1_i32 : i32
    %4 = arith.addi %3, %arg1 : i32
    %c0_i32_1 = arith.constant 0 : i32
    %5 = arith.cmpi slt, %4, %c0_i32_1 : i32
    %6 = arith.extui %5 : i1 to i32
    %c0_i32_2 = arith.constant 0 : i32
    %7 = arith.cmpi ne, %6, %c0_i32_2 : i32
    scf.if %7 {
      %c0 = arith.constant 0 : index
      %c0_5 = arith.constant 0 : index
      %11 = vector.load %arg2[%c0, %c0_5] : memref<64x128xf32, #tpu.memory_space<vmem>>, vector<64x128xf32>
      %c0_6 = arith.constant 0 : index
      %c0_7 = arith.constant 0 : index
      %12 = vector.load %arg3[%c0_6, %c0_7] : memref<64x128xf32, #tpu.memory_space<vmem>>, vector<64x128xf32>
      %13 = vector.shape_cast %11 : vector<64x128xf32> to vector<1x64x128xf32>
      %cst = arith.constant dense<0.000000e+00> : vector<64x128xf32>
      %14 = vector.multi_reduction <add>, %13, %cst [0] : vector<1x64x128xf32> to vector<64x128xf32>
      %15 = arith.addf %12, %14 : vector<64x128xf32>
      %c0_8 = arith.constant 0 : index
      %c0_9 = arith.constant 0 : index
      %16 = vector.load %arg3[%c0_8, %c0_9] : memref<64x128xf32, #tpu.memory_space<vmem>>, vector<64x128xf32>
      tpu.vector_store %arg3[%c0_8, %c0_9], %15 {strides = array<i32>} : memref<64x128xf32, #tpu.memory_space<vmem>>, vector<64x128xf32>,
    } else {
    }
    %c0_i32_3 = arith.constant 0 : i32
    %8 = arith.cmpi sge, %4, %c0_i32_3 : i32
    %9 = arith.extui %8 : i1 to i32
    %c0_i32_4 = arith.constant 0 : i32
    %10 = arith.cmpi ne, %9, %c0_i32_4 : i32
    scf.if %10 {
      %c0 = arith.constant 0 : index
      %c0_5 = arith.constant 0 : index
      %11 = vector.load %arg2[%c0, %c0_5] : memref<64x128xf32, #tpu.memory_space<vmem>>, vector<64x128xf32>
      %c64_i32 = arith.constant 64 : i32
      %12 = arith.muli %4, %c64_i32 : i32
      %c16_i32 = arith.constant 16 : i32
      %13 = arith.subi %c16_i32, %12 : i32
      %14 = tpu.iota {dimensions = array<i32: 0>} : vector<64x128xi32>
      %15 = vector.broadcast %13 : i32 to vector<64x128xi32>
      %16 = arith.cmpi slt, %14, %15 : vector<64x128xi32>
      %cst = arith.constant 0.000000e+00 : f32
      %17 = vector.broadcast %cst : f32 to vector<64x128xf32>
      %18 = arith.select %16, %11, %17 : vector<64x128xi1>, vector<64x128xf32>
      %c0_6 = arith.constant 0 : index
      %c0_7 = arith.constant 0 : index
      %19 = vector.load %arg3[%c0_6, %c0_7] : memref<64x128xf32, #tpu.memory_space<vmem>>, vector<64x128xf32>
      %20 = vector.shape_cast %18 : vector<64x128xf32> to vector<1x64x128xf32>
      %cst_8 = arith.constant dense<0.000000e+00> : vector<64x128xf32>
      %21 = vector.multi_reduction <add>, %20, %cst_8 [0] : vector<1x64x128xf32> to vector<64x128xf32>
      %22 = arith.addf %19, %21 : vector<64x128xf32>
      %c0_9 = arith.constant 0 : index
      %c0_10 = arith.constant 0 : index
      %23 = vector.load %arg3[%c0_9, %c0_10] : memref<64x128xf32, #tpu.memory_space<vmem>>, vector<64x128xf32>
      tpu.vector_store %arg3[%c0_9, %c0_10], %22 {strides = array<i32>} : memref<64x128xf32, #tpu.memory_space<vmem>>, vector<64x128xf32>,
    } else {
    }
    return
  }
  func.func @transform_0(%arg0: i32, %arg1: i32) -> (i32, i32) {
    %c1_i32 = arith.constant 1 : i32
    %0 = arith.muli %arg0, %c1_i32 : i32
    %1 = arith.addi %0, %arg1 : i32
    %c0_i32 = arith.constant 0 : i32
    %2 = arith.minsi %1, %c0_i32 : i32
    %c0_i32_0 = arith.constant 0 : i32
    %c0_i32_1 = arith.constant 0 : i32
    return %2, %c0_i32_0 : i32, i32
  }
  func.func @transform_1(%arg0: i32, %arg1: i32) -> (i32, i32) {
    %c0_i32 = arith.constant 0 : i32
    %c0_i32_0 = arith.constant 0 : i32
    return %arg0, %c0_i32 : i32, i32
  }
}

</mosaic_0001>

<llo_original>
// kernel: tpu_custom_call.1
$region0: #{tpu_custom_call.1}
  #allocation0 [shape = 'u32[]', space=smem, size = 0x4, offset = 0x4, fixed_abs, tag = 'smem constant byte address 0x4 - core index']
  #allocation1 [shape = 'u32[144,128]{1,0:T(1,128)}', space=vmem, size = 0x12000, scoped, tag = 'internal scratch']
  %s0 = inlined_call_operand.hbm [shape: f32[16,128], index: 0, kind: input, shape index: {}]
  %s1 = inlined_call_operand.hbm [shape: f32[64,128], index: 1, kind: output, shape index: {}]
  %s2 = sld [smem:[#allocation0]]
  $region30: #{tpu_custom_call.1} parent=0
    _
  %s4 = ssub.s32 1, %s2
  %s5 = scalar_select 0, %s4, %s2
  $region1: #{tpu_custom_call.1} parent=0
    #allocation2 [shape = 'u8[32768]{0}', space=vmem, size = 0x8000, scoped, tag = 'input window, operand 0, single buffered']
    #allocation3 [shape = 's32[1]{0}', space=sflag, size = 0x4, scoped, tag = 'scoped memory for tpu_custom_call.1']
    #allocation4 [shape = 's32[1]{0}', space=sflag, size = 0x4, scoped, tag = 'scoped memory for tpu_custom_call.1']
    #allocation5 [shape = 'u8[32768]{0}', space=vmem, size = 0x8000, scoped, tag = 'output window, operand 0, single buffered']
    %6 = vsyncpa [#allocation3], 0
    %7 = vsyncpa [#allocation4], 0
    // Predicated region
    $region2: #{tpu_custom_call.1} parent=1 // pred_check
      _
    $region3: #{tpu_custom_call.1} parent=1 // pred_check_branch
      %9 = sbr.rel (0) target = $region5
    $region4: #{tpu_custom_call.1} parent=1 // pred_region
      %s10 = sadd.s32 0, 0
      %p11 = scmp.lt.s32.totalorder %s10, 0
      %s12 = scalar_select %p11, %s10, 0
      %s13 = smul.u32 8, %s12
      %s14 = ssub.s32 2, %s13
      %s15 = smul.u32 128, %s14
      %s17 = ssub.s32 1024, %s15
      %18 = vsyncadd [#allocation3], %s17
      %p19 = scmp.ne.s32.totalorder 0, %s15
      %s20 = smul.addr %s13, 128
      %s21 = scalar_lea.hbm %s0, %s20
      %s22 = smul.u32 8, %s14
      %s23 = sshll.u32 [#allocation2], 4
      %s24 = int_to_ptr.vmem [resolvable:$true] %s23
      %s25 = sshll.u32 %s22, 4
      %29 = dma.hbm_to_vmem [thread:$0]  (%p19), %s21, %s25, %s24, [#allocation3], 128, 128, 8
    $region5: #{tpu_custom_call.1} parent=1 // pred_fallthru
      _
    // Predicated region
    $region6: #{tpu_custom_call.1} parent=1 // pred_check
      _
    $region7: #{tpu_custom_call.1} parent=1 // pred_check_branch
      %31 = sbr.rel (0) target = $region9
    $region8: #{tpu_custom_call.1} parent=1 // pred_region
      %32 = dma.done [#allocation3], 1024
    $region9: #{tpu_custom_call.1} parent=1 // pred_fallthru
      _
    %s33 = sadd.s32 0, 0
    %p34 = scmp.lt.s32.totalorder %s33, 0
    %s35 = scalar_select %p34, %s33, 0
    %s36 = smul.u32 8, %s35
    %s37 = ssub.s32 2, %s36
    %s38 = smul.u32 128, %s37
    %p39 = scmp.eq.s32.totalorder 0, 0
    // Predicated region
    $region10: #{tpu_custom_call.1} parent=1 // pred_check
      %p40 = pneg %p39
    $region11: #{tpu_custom_call.1} parent=1 // pred_check_branch
      %42 = sbr.rel (%p40) target = $region13
    $region12: #{tpu_custom_call.1} parent=1 // pred_region
      %43 = vst [vmem:[#allocation5] sm:$0xff] 0.0
      %44 = vst [vmem:[#allocation5 + $0x8] sm:$0xff] 0.0
      %45 = vst [vmem:[#allocation5 + $0x10] sm:$0xff] 0.0
      %46 = vst [vmem:[#allocation5 + $0x18] sm:$0xff] 0.0
      %47 = vst [vmem:[#allocation5 + $0x20] sm:$0xff] 0.0
      %48 = vst [vmem:[#allocation5 + $0x28] sm:$0xff] 0.0
      %49 = vst [vmem:[#allocation5 + $0x30] sm:$0xff] 0.0
      %50 = vst [vmem:[#allocation5 + $0x38] sm:$0xff] 0.0
    $region13: #{tpu_custom_call.1} parent=1 // pred_fallthru
      _
    %s51 = sadd.s32 0, 0
    %p52 = scmp.lt.s32.totalorder %s51, 0
    // Predicated region
    $region14: #{tpu_custom_call.1} parent=1 // pred_check
      %p53 = pneg %p52
    $region15: #{tpu_custom_call.1} parent=1 // pred_check_branch
      %55 = sbr.rel (%p53) target = $region17
    $region16: #{tpu_custom_call.1} parent=1 // pred_region
      %v56 = vld [vmem:[#allocation2] sm:$0xff]
      %v57 = vld [vmem:[#allocation2 + $0x8] sm:$0xff]
      %v58 = vld [vmem:[#allocation2 + $0x10] sm:$0xff]
      %v59 = vld [vmem:[#allocation2 + $0x18] sm:$0xff]
      %v60 = vld [vmem:[#allocation2 + $0x20] sm:$0xff]
      %v61 = vld [vmem:[#allocation2 + $0x28] sm:$0xff]
      %v62 = vld [vmem:[#allocation2 + $0x30] sm:$0xff]
      %v63 = vld [vmem:[#allocation2 + $0x38] sm:$0xff]
      %v64 = vld [vmem:[#allocation5] sm:$0xff]
      %v65 = vld [vmem:[#allocation5 + $0x8] sm:$0xff]
      %v66 = vld [vmem:[#allocation5 + $0x10] sm:$0xff]
      %v67 = vld [vmem:[#allocation5 + $0x18] sm:$0xff]
      %v68 = vld [vmem:[#allocation5 + $0x20] sm:$0xff]
      %v69 = vld [vmem:[#allocation5 + $0x28] sm:$0xff]
      %v70 = vld [vmem:[#allocation5 + $0x30] sm:$0xff]
      %v71 = vld [vmem:[#allocation5 + $0x38] sm:$0xff]
      %v72 = vadd.f32 %v56, 0.0
      %v73 = vadd.f32 %v57, 0.0
      %v74 = vadd.f32 %v58, 0.0
      %v75 = vadd.f32 %v59, 0.0
      %v76 = vadd.f32 %v60, 0.0
      %v77 = vadd.f32 %v61, 0.0
      %v78 = vadd.f32 %v62, 0.0
      %v79 = vadd.f32 %v63, 0.0
      %v80 = vadd.f32 %v64, %v72
      %v81 = vadd.f32 %v65, %v73
      %v82 = vadd.f32 %v66, %v74
      %v83 = vadd.f32 %v67, %v75
      %v84 = vadd.f32 %v68, %v76
      %v85 = vadd.f32 %v69, %v77
      %v86 = vadd.f32 %v70, %v78
      %v87 = vadd.f32 %v71, %v79
      %88 = vst [vmem:[#allocation5] sm:$0xff] %v80
      %89 = vst [vmem:[#allocation5 + $0x8] sm:$0xff] %v81
      %90 = vst [vmem:[#allocation5 + $0x10] sm:$0xff] %v82
      %91 = vst [vmem:[#allocation5 + $0x18] sm:$0xff] %v83
      %92 = vst [vmem:[#allocation5 + $0x20] sm:$0xff] %v84
      %93 = vst [vmem:[#allocation5 + $0x28] sm:$0xff] %v85
      %94 = vst [vmem:[#allocation5 + $0x30] sm:$0xff] %v86
      %95 = vst [vmem:[#allocation5 + $0x38] sm:$0xff] %v87
    $region17: #{tpu_custom_call.1} parent=1 // pred_fallthru
      _
    %p96 = scmp.ge.s32.totalorder %s51, 0
    // Predicated region
    $region18: #{tpu_custom_call.1} parent=1 // pred_check
      %p97 = pneg %p96
    $region19: #{tpu_custom_call.1} parent=1 // pred_check_branch
      %99 = sbr.rel (%p97) target = $region21
    $region20: #{tpu_custom_call.1} parent=1 // pred_region
      %v100 = vld [vmem:[#allocation2] sm:$0xff]
      %v101 = vld [vmem:[#allocation2 + $0x8] sm:$0xff]
      %v102 = vld [vmem:[#allocation2 + $0x10] sm:$0xff]
      %v103 = vld [vmem:[#allocation2 + $0x18] sm:$0xff]
      %v104 = vld [vmem:[#allocation2 + $0x20] sm:$0xff]
      %v105 = vld [vmem:[#allocation2 + $0x28] sm:$0xff]
      %v106 = vld [vmem:[#allocation2 + $0x30] sm:$0xff]
      %v107 = vld [vmem:[#allocation2 + $0x38] sm:$0xff]
      %s108 = smul.u32 %s51, 64
      %s109 = ssub.s32 16, %s108
      %v110 = vlaneseq
      %v111 = vshrl.u32 %v110, 7
      %v112 = vadd.s32 %v111, 8
      %v113 = vadd.s32 %v111, 16
      %v114 = vadd.s32 %v111, 24
      %v115 = vadd.s32 %v111, 32
      %v116 = vadd.s32 %v111, 40
      %v117 = vadd.s32 %v111, 48
      %v118 = vadd.s32 %v111, 56
      %v119 = vstv %s109
      %vm120 = vcmp.lt.s32.totalorder %v111, %v119
      %vm121 = vcmp.lt.s32.totalorder %v112, %v119
      %vm122 = vcmp.lt.s32.totalorder %v113, %v119
      %vm123 = vcmp.lt.s32.totalorder %v114, %v119
      %vm124 = vcmp.lt.s32.totalorder %v115, %v119
      %vm125 = vcmp.lt.s32.totalorder %v116, %v119
      %vm126 = vcmp.lt.s32.totalorder %v117, %v119
      %vm127 = vcmp.lt.s32.totalorder %v118, %v119
      %v128 = vsel %vm120, %v100, 0.0
      %v129 = vsel %vm121, %v101, 0.0
      %v130 = vsel %vm122, %v102, 0.0
      %v131 = vsel %vm123, %v103, 0.0
      %v132 = vsel %vm124, %v104, 0.0
      %v133 = vsel %vm125, %v105, 0.0
      %v134 = vsel %vm126, %v106, 0.0
      %v135 = vsel %vm127, %v107, 0.0
      %v136 = vld [vmem:[#allocation5] sm:$0xff]
      %v137 = vld [vmem:[#allocation5 + $0x8] sm:$0xff]
      %v138 = vld [vmem:[#allocation5 + $0x10] sm:$0xff]
      %v139 = vld [vmem:[#allocation5 + $0x18] sm:$0xff]
      %v140 = vld [vmem:[#allocation5 + $0x20] sm:$0xff]
      %v141 = vld [vmem:[#allocation5 + $0x28] sm:$0xff]
      %v142 = vld [vmem:[#allocation5 + $0x30] sm:$0xff]
      %v143 = vld [vmem:[#allocation5 + $0x38] sm:$0xff]
      %v144 = vadd.f32 %v128, 0.0
      %v145 = vadd.f32 %v129, 0.0
      %v146 = vadd.f32 %v130, 0.0
      %v147 = vadd.f32 %v131, 0.0
      %v148 = vadd.f32 %v132, 0.0
      %v149 = vadd.f32 %v133, 0.0
      %v150 = vadd.f32 %v134, 0.0
      %v151 = vadd.f32 %v135, 0.0
      %v152 = vadd.f32 %v136, %v144
      %v153 = vadd.f32 %v137, %v145
      %v154 = vadd.f32 %v138, %v146
      %v155 = vadd.f32 %v139, %v147
      %v156 = vadd.f32 %v140, %v148
      %v157 = vadd.f32 %v141, %v149
      %v158 = vadd.f32 %v142, %v150
      %v159 = vadd.f32 %v143, %v151
      %160 = vst [vmem:[#allocation5] sm:$0xff] %v152
      %161 = vst [vmem:[#allocation5 + $0x8] sm:$0xff] %v153
      %162 = vst [vmem:[#allocation5 + $0x10] sm:$0xff] %v154
      %163 = vst [vmem:[#allocation5 + $0x18] sm:$0xff] %v155
      %164 = vst [vmem:[#allocation5 + $0x20] sm:$0xff] %v156
      %165 = vst [vmem:[#allocation5 + $0x28] sm:$0xff] %v157
      %166 = vst [vmem:[#allocation5 + $0x30] sm:$0xff] %v158
      %167 = vst [vmem:[#allocation5 + $0x38] sm:$0xff] %v159
    $region21: #{tpu_custom_call.1} parent=1 // pred_fallthru
      _
    // Predicated region
    $region22: #{tpu_custom_call.1} parent=1 // pred_check
      _
    $region23: #{tpu_custom_call.1} parent=1 // pred_check_branch
      %169 = sbr.rel (0) target = $region25
    $region24: #{tpu_custom_call.1} parent=1 // pred_region
      %s171 = ssub.s32 1024, 1024
      %172 = vsyncadd [#allocation4], %s171
      %s173 = sshll.u32 [#allocation5], 4
      %s174 = int_to_ptr.vmem [resolvable:$true] %s173
      %179 = dma.vmem_to_hbm [thread:$0]  %s174, 1024, %s1, [#allocation4], 128, 128, 8
    $region25: #{tpu_custom_call.1} parent=1 // pred_fallthru
      _
    // Predicated region
    $region26: #{tpu_custom_call.1} parent=1 // pred_check
      _
    $region27: #{tpu_custom_call.1} parent=1 // pred_check_branch
      %181 = sbr.rel (0) target = $region29
    $region28: #{tpu_custom_call.1} parent=1 // pred_region
      %182 = dma.done [#allocation4], 1024
    $region29: #{tpu_custom_call.1} parent=1 // pred_fallthru
      _
    %183 = vsyncpa [#allocation3], 1
    %184 = vsyncpa [#allocation4], 1

</llo_original>
